<compile_context>
chip_gen: v7x
topology: tpu7x:2x2x1
jax: 0.10.0
libtpu: 0.0.40
codegen_flags: <defaults>
</compile_context>

<pallas_src>
from functools import partial

import jax
import jax.numpy as jnp
from jax.experimental import pallas as pl
from jax.experimental.pallas import tpu as pltpu


def _round_up(x, m):
    return ((x + m - 1) // m) * m


# ---------------------------------------------------------------------------
# Pallas kernels
# ---------------------------------------------------------------------------
def _gemm_bias_kernel(x_ref, w_ref, b_ref, o_ref):
    """Single-K-tile path: one MXU GEMM, bias add, direct store (no scratch)."""
    acc = jnp.dot(x_ref[...], w_ref[...], preferred_element_type=jnp.float32)
    o_ref[...] = (acc + b_ref[...]).astype(o_ref.dtype)


def _gemm_bias_ktiled_kernel(x_ref, w_ref, b_ref, o_ref, acc_ref):
    """K-tiled path: f32 VMEM accumulator; bias folded into the k==0 init."""
    kk = pl.program_id(2)

    @pl.when(kk == 0)
    def _init():
        acc_ref[...] = jnp.broadcast_to(b_ref[...], acc_ref.shape)

    acc_ref[...] += jnp.dot(x_ref[...], w_ref[...],
                            preferred_element_type=jnp.float32)

    @pl.when(kk == pl.num_programs(2) - 1)
    def _writeback():
        o_ref[...] = acc_ref[...].astype(o_ref.dtype)


# ---------------------------------------------------------------------------
# Packing / tiling heuristics
# ---------------------------------------------------------------------------
def _choose_packing(groups, K, N):
    """Pick (g_sub, tk): g_sub groups are processed per GEMM (block-diagonal
    weight) so the output tile spans Nc = g_sub*N lanes -- a multiple of 128
    when possible, else the full out_dim; tk is a K tile that is a multiple of
    128 (or the full per-chunk K when the chunk spans all groups)."""
    def tk_for(Kc, is_full_k):
        for cand in (512, 256, 128):
            if Kc % cand == 0:
                return cand
        return Kc if is_full_k else None

    candidates = [g for g in range(1, groups + 1)
                  if groups % g == 0 and (g * N) % 128 == 0]
    candidates.append(groups)            # full pack: Nc == out_dim, always legal
    for g_sub in candidates:
        tk = tk_for(g_sub * K, g_sub == groups)
        if tk is not None:
            return g_sub, tk
    return groups, groups * K            # unreachable fallback


def _pack_groups(w, b, g_sub):
    """w: (G, N, K) torch-Linear layout; b: (G, N).
    Returns block-diagonal weights (Gc, g_sub*K, g_sub*N) and f32 bias
    (Gc, 1, g_sub*N) with Gc = G // g_sub."""
    G, N, K = w.shape
    gc = G // g_sub
    wT = jnp.transpose(w, (0, 2, 1)).reshape(gc, g_sub, K, N)   # (Gc, gs, K, N)
    eye = jnp.eye(g_sub, dtype=wT.dtype)
    w_packed = jnp.einsum("cgkn,gh->cgkhn", wT, eye)
    w_packed = w_packed.reshape(gc, g_sub * K, g_sub * N)
    b_packed = b.reshape(gc, 1, g_sub * N).astype(jnp.float32)
    return w_packed, b_packed


def _choose_m_tile(M, tk, Nc, itemsize, budget_bytes=28 * 1024 * 1024):
    """Largest M tile (rows) whose double-buffered working set fits the budget."""
    cap = _round_up(M, 8)
    cands = [mt for mt in (1024, 512, 256, 128, 64, 32, 16, 8) if mt <= cap]
    if cap < 1024 and cap not in cands:
        cands.insert(0, cap)
    for mt in cands:
        vmem = (2 * mt * tk * itemsize        # x tiles, double-buffered
                + 2 * tk * Nc * itemsize      # packed weights, double-buffered
                + 2 * Nc * 4                  # bias
                + 2 * mt * Nc * itemsize      # output tile, double-buffered
                + mt * Nc * 4)                # f32 accumulator scratch
        if vmem <= budget_bytes:
            return mt
    return 8


# ---------------------------------------------------------------------------
# Packed grouped GEMM driver
# ---------------------------------------------------------------------------
def packed_grouped_gemm(x2d, w_packed, b_packed, tk):
    """out[m, c*Nc:(c+1)*Nc] = x2d[m, c*Kc:(c+1)*Kc] @ w_packed[c] + b_packed[c]."""
    M, GK = x2d.shape
    gc, Kc, Nc = w_packed.shape
    assert gc * Kc == GK and Kc % tk == 0
    kpc = Kc // tk                          # K tiles per group chunk
    m_tile = _choose_m_tile(M, tk, Nc, x2d.dtype.itemsize)
    m_tiles = pl.cdiv(M, m_tile)
    out_shape = jax.ShapeDtypeStruct((M, gc * Nc), x2d.dtype)
    vmem_limit = 48 * 1024 * 1024

    if kpc == 1:
        # K fits in one tile: no accumulator scratch, no pl.when branches.
        return pl.pallas_call(
            _gemm_bias_kernel,
            out_shape=out_shape,
            grid_spec=pltpu.PrefetchScalarGridSpec(
                num_scalar_prefetch=0,
                grid=(m_tiles, gc),
                in_specs=[
                    pl.BlockSpec((m_tile, Kc), lambda m, c: (m, c)),
                    pl.BlockSpec((pl.Squeezed(), Kc, Nc), lambda m, c: (c, 0, 0)),
                    pl.BlockSpec((pl.Squeezed(), 1, Nc), lambda m, c: (c, 0, 0)),
                ],
                out_specs=pl.BlockSpec((m_tile, Nc), lambda m, c: (m, c)),
            ),
            compiler_params=pltpu.CompilerParams(
                dimension_semantics=("parallel", "parallel"),
                vmem_limit_bytes=vmem_limit),
        )(x2d, w_packed, b_packed)

    return pl.pallas_call(
        _gemm_bias_ktiled_kernel,
        out_shape=out_shape,
        grid_spec=pltpu.PrefetchScalarGridSpec(
            num_scalar_prefetch=0,
            grid=(m_tiles, gc, kpc),        # M leading (parallel), K last (reduce)
            in_specs=[
                pl.BlockSpec((m_tile, tk),
                             lambda m, c, kk, kpc=kpc: (m, c * kpc + kk)),
                pl.BlockSpec((pl.Squeezed(), tk, Nc),
                             lambda m, c, kk: (c, kk, 0)),
                pl.BlockSpec((pl.Squeezed(), 1, Nc),
                             lambda m, c, kk: (c, 0, 0)),
            ],
            out_specs=pl.BlockSpec((m_tile, Nc), lambda m, c, kk: (m, c)),
            scratch_shapes=[pltpu.VMEM((m_tile, Nc), jnp.float32)],
        ),
        compiler_params=pltpu.CompilerParams(
            dimension_semantics=("parallel", "parallel", "arbitrary"),
            vmem_limit_bytes=vmem_limit),
    )(x2d, w_packed, b_packed)


# ---------------------------------------------------------------------------
# Wrapper: im2col (F.unfold semantics) + packed grouped GEMM + torch reshape.
# ---------------------------------------------------------------------------
def _im2col(x, kernel_size, stride, padding):
    """F.unfold-equivalent patch extraction.
    Returns (B*oh*ow, C*k*k) with feature order [channel][ki*k + kj] (unfold
    order, so per-group K blocks are contiguous) and row order [b][i][j]."""
    B, C, H, W = x.shape
    k = kernel_size
    oh = (H + 2 * padding - k) // stride + 1
    ow = (W + 2 * padding - k) // stride + 1
    xp = jnp.pad(x, ((0, 0), (0, 0), (padding, padding), (padding, padding)))
    cols = []
    for ki in range(k):
        for kj in range(k):
            cols.append(xp[:, :,
                           ki:ki + stride * (oh - 1) + 1:stride,
                           kj:kj + stride * (ow - 1) + 1:stride])
    p = jnp.stack(cols, axis=2)                  # (B, C, k*k, oh, ow)
    p = jnp.transpose(p, (0, 3, 4, 1, 2))        # (B, oh, ow, C, k*k)
    return p.reshape(B * oh * ow, C * k * k), oh, ow


def grouped_conv2d_forward(x, w, b, *, kernel_size, stride, padding, groups):
    """Forward of GroupedConv2d.
    x: (B, C, H, W); w: (groups, group_out_dim, group_in_dim*k*k) torch Linear
    layout; b: (groups, group_out_dim)."""
    B = x.shape[0]
    N = w.shape[1]
    K = w.shape[2]
    out_dim = groups * N

    # TODO(synk): fuse the unfold into the kernel (manual DMA from the padded
    # NCHW input or a k*k shifted-matmul reduction axis) to avoid this k^2
    # activation expansion in HBM.
    x2d, oh, ow = _im2col(x, kernel_size, stride, padding)   # (M, groups*K)
    L = oh * ow

    g_sub, tk = _choose_packing(groups, K, N)
    w_packed, b_packed = _pack_groups(w, b, g_sub)

    y2d = packed_grouped_gemm(x2d, w_packed, b_packed, tk)   # (M, out_dim), col=[g][n]
    y = y2d.reshape(B, L, groups, N).transpose(0, 2, 1, 3)   # (B, G, L, N)
    # Mirrors torch.cat(outputs, dim=1).view(B, out_dim, oh, ow) exactly.
    return y.reshape(B, out_dim, oh, ow)


# ---------------------------------------------------------------------------
# Independent reference (grouped lax.conv + the module's quirky view).
# ---------------------------------------------------------------------------
def _reference(x, w, b, *, kernel_size, stride, padding, groups):
    B, C, H, W = x.shape
    k = kernel_size
    Cg = C // groups
    N = w.shape[1]
    out_dim = groups * N
    cw = w.reshape(groups, N, Cg, k, k).reshape(out_dim, Cg, k, k)
    y = jax.lax.conv_general_dilated(
        x, cw, window_strides=(stride, stride),
        padding=[(padding, padding), (padding, padding)],
        dimension_numbers=("NCHW", "OIHW", "NCHW"),
        feature_group_count=groups,
        precision=jax.lax.Precision.HIGHEST)
    y = y + b.reshape(1, out_dim, 1, 1)
    oh, ow = y.shape[2], y.shape[3]
    # Reproduce the module's cat(dim=1).view(...) reinterpretation.
    y = y.reshape(B, groups, N, oh * ow).transpose(0, 1, 3, 2)   # (B, G, L, N)
    return y.reshape(B, out_dim, oh, ow)


if __name__ == "__main__":
    # (in_dim, out_dim, k, stride, padding, groups, B, H, W)
    configs = [
        # Main config: lane-dense packed output (Nc = 128), single-K-tile path.
        (8, 128, 3, 1, 1, 2, 2, 16, 16),
        # Tiny group_out_dim -> full group pack (Nc = out_dim), strided conv,
        # M not a multiple of the tile (exercises partial-block handling).
        (8, 8, 3, 2, 1, 2, 1, 9, 9),
        # Multi-chunk + K-tiled path: g_sub=2 -> 2 chunks, Nc=256, tk=128.
        (256, 512, 3, 1, 1, 4, 2, 8, 8),
    ]

    key = jax.random.PRNGKey(0)
    for (in_dim, out_dim, ksz, stride, padding, groups, B, H, W) in configs:
        group_in_dim = in_dim // groups
        group_out_dim = out_dim // groups
        K = group_in_dim * ksz * ksz

        key, kx, kw, kb = jax.random.split(key, 4)
        x = jax.random.normal(kx, (B, in_dim, H, W), dtype=jnp.float32)
        w = jax.random.normal(kw, (groups, group_out_dim, K),
                              dtype=jnp.float32) * 0.1
        b = jax.random.normal(kb, (groups, group_out_dim),
                              dtype=jnp.float32) * 0.1

        fwd = jax.jit(partial(grouped_conv2d_forward, kernel_size=ksz,
                              stride=stride, padding=padding, groups=groups))
        out = jax.block_until_ready(fwd(x, w, b))

        ref = _reference(x, w, b, kernel_size=ksz, stride=stride,
                         padding=padding, groups=groups)
        oh = (H + 2 * padding - ksz) // stride + 1
        ow = (W + 2 * padding - ksz) // stride + 1
        assert out.shape == (B, out_dim, oh, ow), out.shape
        assert jnp.allclose(out, ref, atol=5e-3, rtol=5e-3), (
            f"mismatch vs reference for config {(in_dim, out_dim, groups)}")

    print("KERNEL_OK")
</pallas_src>

<mosaic_0001>
module attributes {stable_mosaic.version = 11 : i64} {
  func.func @_gemm_bias_kernel(%arg0: i32, %arg1: i32, %arg2: memref<512x72xf32, #tpu.memory_space<vmem>>, %arg3: memref<1x72x128xf32, #tpu.memory_space<vmem>>, %arg4: memref<1x1x128xf32, #tpu.memory_space<vmem>>, %arg5: memref<512x128xf32, #tpu.memory_space<vmem>>) attributes {dimension_semantics = [#tpu.dimension_semantics<parallel>, #tpu.dimension_semantics<parallel>], iteration_bounds = array<i64: 1, 1>, scalar_prefetch = 0 : i64, scratch_operands = 0 : i64, tpu.core_type = #tpu.core_type<tc>, window_params = [{transform_indices = @transform_0, window_bounds = array<i64: 512, 72>}, {transform_indices = @transform_1, window_bounds = array<i64: 1, 72, 128>}, {transform_indices = @transform_2, window_bounds = array<i64: 1, 1, 128>}, {transform_indices = @transform_3, window_bounds = array<i64: 512, 128>}]} {
    %c0 = arith.constant 0 : index
    %c0_0 = arith.constant 0 : index
    %0 = vector.load %arg2[%c0, %c0_0] : memref<512x72xf32, #tpu.memory_space<vmem>>, vector<512x72xf32>
    %c0_1 = arith.constant 0 : index
    %c0_2 = arith.constant 0 : index
    %c0_3 = arith.constant 0 : index
    %1 = vector.load %arg3[%c0_1, %c0_2, %c0_3] : memref<1x72x128xf32, #tpu.memory_space<vmem>>, vector<1x72x128xf32>
    %2 = vector.shape_cast %1 : vector<1x72x128xf32> to vector<72x128xf32>
    %cst = arith.constant dense<0.000000e+00> : vector<512x128xf32>
    %3 = tpu.matmul %0, %2, %cst {dimension_numbers = #tpu.dot_dimension_numbers<[1], [0], [0], [1], [0, 0, 1, 1], [], []>} : vector<512x72xf32>, vector<72x128xf32>, vector<512x128xf32> -> vector<512x128xf32>
    %c0_4 = arith.constant 0 : index
    %c0_5 = arith.constant 0 : index
    %c0_6 = arith.constant 0 : index
    %4 = vector.load %arg4[%c0_4, %c0_5, %c0_6] : memref<1x1x128xf32, #tpu.memory_space<vmem>>, vector<1x1x128xf32>
    %5 = vector.shape_cast %4 : vector<1x1x128xf32> to vector<1x128xf32>
    %6 = vector.broadcast %5 : vector<1x128xf32> to vector<512x128xf32>
    %7 = arith.addf %3, %6 : vector<512x128xf32>
    %c0_7 = arith.constant 0 : index
    %c0_8 = arith.constant 0 : index
    %8 = vector.load %arg5[%c0_7, %c0_8] : memref<512x128xf32, #tpu.memory_space<vmem>>, vector<512x128xf32>
    tpu.vector_store %arg5[%c0_7, %c0_8], %7 {strides = array<i32>} : memref<512x128xf32, #tpu.memory_space<vmem>>, vector<512x128xf32>,
    return
  }
  func.func @transform_0(%arg0: i32, %arg1: i32) -> (i32, i32) {
    %c0_i32 = arith.constant 0 : i32
    return %arg0, %arg1 : i32, i32
  }
  func.func @transform_1(%arg0: i32, %arg1: i32) -> (i32, i32, i32) {
    %c0_i32 = arith.constant 0 : i32
    %c0_i32_0 = arith.constant 0 : i32
    %c0_i32_1 = arith.constant 0 : i32
    return %arg1, %c0_i32, %c0_i32_0 : i32, i32, i32
  }
  func.func @transform_2(%arg0: i32, %arg1: i32) -> (i32, i32, i32) {
    %c0_i32 = arith.constant 0 : i32
    %c0_i32_0 = arith.constant 0 : i32
    %c0_i32_1 = arith.constant 0 : i32
    return %arg1, %c0_i32, %c0_i32_0 : i32, i32, i32
  }
  func.func @transform_3(%arg0: i32, %arg1: i32) -> (i32, i32) {
    %c0_i32 = arith.constant 0 : i32
    return %arg0, %arg1 : i32, i32
  }
}

</mosaic_0001>

<llo_original>
// kernel: grouped_conv2d_forward.1
$region0: #{grouped_conv2d_forward.1}
  #allocation0 [shape = 'u32[]', space=smem, size = 0x4, offset = 0x4, fixed_abs, tag = 'smem constant byte address 0x4 - core index']
  #allocation1 [shape = 'u32[144,128]{1,0:T(1,128)}', space=vmem, size = 0x12000, scoped, tag = 'internal scratch']
  %s0 = inlined_call_operand.vmem [shape: f32[512,72], index: 0, kind: input, shape index: {}]
  %s1 = inlined_call_operand.vmem [shape: f32[1,72,128], index: 1, kind: input, shape index: {}]
  %s2 = inlined_call_operand.vmem [shape: f32[1,1,128], index: 2, kind: input, shape index: {}]
  %s3 = inlined_call_operand.vmem [shape: f32[512,128], index: 3, kind: output, shape index: {}]
  %s4 = sld [smem:[#allocation0]]
  $region22: #{grouped_conv2d_forward.1} parent=0
    _
  %s6 = ssub.s32 1, %s4
  %s7 = scalar_select 0, %s6, %s4
  // Predicated region
  $region2: #{grouped_conv2d_forward.1} parent=0 // pred_check
    _
  $region3: #{grouped_conv2d_forward.1} parent=0 // pred_check_branch
    %9 = sbr.rel (0) target = $region5
  $region4: #{grouped_conv2d_forward.1} parent=0 // pred_region
    _
  $region5: #{grouped_conv2d_forward.1} parent=0 // pred_fallthru
    _
  // Predicated region
  $region6: #{grouped_conv2d_forward.1} parent=0 // pred_check
    _
  $region7: #{grouped_conv2d_forward.1} parent=0 // pred_check_branch
    %11 = sbr.rel (0) target = $region9
  $region8: #{grouped_conv2d_forward.1} parent=0 // pred_region
    _
  $region9: #{grouped_conv2d_forward.1} parent=0 // pred_fallthru
    _
  // Predicated region
  $region10: #{grouped_conv2d_forward.1} parent=0 // pred_check
    _
  $region11: #{grouped_conv2d_forward.1} parent=0 // pred_check_branch
    %13 = sbr.rel (0) target = $region13
  $region12: #{grouped_conv2d_forward.1} parent=0 // pred_region
    _
  $region13: #{grouped_conv2d_forward.1} parent=0 // pred_fallthru
    _
  %v14 = vld [vmem:[%s0] sm:$0xff]
  %v15 = vld [vmem:[%s0 + $0x8] sm:$0xff]
  %v16 = vld [vmem:[%s0 + $0x10] sm:$0xff]
  %v17 = vld [vmem:[%s0 + $0x18] sm:$0xff]
  %v18 = vld [vmem:[%s0 + $0x20] sm:$0xff]
  %v19 = vld [vmem:[%s0 + $0x28] sm:$0xff]
  %v20 = vld [vmem:[%s0 + $0x30] sm:$0xff]
  %v21 = vld [vmem:[%s0 + $0x38] sm:$0xff]
  %v22 = vld [vmem:[%s0 + $0x40] sm:$0xff]
  %v23 = vld [vmem:[%s0 + $0x48] sm:$0xff]
  %v24 = vld [vmem:[%s0 + $0x50] sm:$0xff]
  %v25 = vld [vmem:[%s0 + $0x58] sm:$0xff]
  %v26 = vld [vmem:[%s0 + $0x60] sm:$0xff]
  %v27 = vld [vmem:[%s0 + $0x68] sm:$0xff]
  %v28 = vld [vmem:[%s0 + $0x70] sm:$0xff]
  %v29 = vld [vmem:[%s0 + $0x78] sm:$0xff]
  %v30 = vld [vmem:[%s0 + $0x80] sm:$0xff]
  %v31 = vld [vmem:[%s0 + $0x88] sm:$0xff]
  %v32 = vld [vmem:[%s0 + $0x90] sm:$0xff]
  %v33 = vld [vmem:[%s0 + $0x98] sm:$0xff]
  %v34 = vld [vmem:[%s0 + $0xa0] sm:$0xff]
  %v35 = vld [vmem:[%s0 + $0xa8] sm:$0xff]
  %v36 = vld [vmem:[%s0 + $0xb0] sm:$0xff]
  %v37 = vld [vmem:[%s0 + $0xb8] sm:$0xff]
  %v38 = vld [vmem:[%s0 + $0xc0] sm:$0xff]
  %v39 = vld [vmem:[%s0 + $0xc8] sm:$0xff]
  %v40 = vld [vmem:[%s0 + $0xd0] sm:$0xff]
  %v41 = vld [vmem:[%s0 + $0xd8] sm:$0xff]
  %v42 = vld [vmem:[%s0 + $0xe0] sm:$0xff]
  %v43 = vld [vmem:[%s0 + $0xe8] sm:$0xff]
  %v44 = vld [vmem:[%s0 + $0xf0] sm:$0xff]
  %v45 = vld [vmem:[%s0 + $0xf8] sm:$0xff]
  %v46 = vld [vmem:[%s0 + $0x100] sm:$0xff]
  %v47 = vld [vmem:[%s0 + $0x108] sm:$0xff]
  %v48 = vld [vmem:[%s0 + $0x110] sm:$0xff]
  %v49 = vld [vmem:[%s0 + $0x118] sm:$0xff]
  %v50 = vld [vmem:[%s0 + $0x120] sm:$0xff]
  %v51 = vld [vmem:[%s0 + $0x128] sm:$0xff]
  %v52 = vld [vmem:[%s0 + $0x130] sm:$0xff]
  %v53 = vld [vmem:[%s0 + $0x138] sm:$0xff]
  %v54 = vld [vmem:[%s0 + $0x140] sm:$0xff]
  %v55 = vld [vmem:[%s0 + $0x148] sm:$0xff]
  %v56 = vld [vmem:[%s0 + $0x150] sm:$0xff]
  %v57 = vld [vmem:[%s0 + $0x158] sm:$0xff]
  %v58 = vld [vmem:[%s0 + $0x160] sm:$0xff]
  %v59 = vld [vmem:[%s0 + $0x168] sm:$0xff]
  %v60 = vld [vmem:[%s0 + $0x170] sm:$0xff]
  %v61 = vld [vmem:[%s0 + $0x178] sm:$0xff]
  %v62 = vld [vmem:[%s0 + $0x180] sm:$0xff]
  %v63 = vld [vmem:[%s0 + $0x188] sm:$0xff]
  %v64 = vld [vmem:[%s0 + $0x190] sm:$0xff]
  %v65 = vld [vmem:[%s0 + $0x198] sm:$0xff]
  %v66 = vld [vmem:[%s0 + $0x1a0] sm:$0xff]
  %v67 = vld [vmem:[%s0 + $0x1a8] sm:$0xff]
  %v68 = vld [vmem:[%s0 + $0x1b0] sm:$0xff]
  %v69 = vld [vmem:[%s0 + $0x1b8] sm:$0xff]
  %v70 = vld [vmem:[%s0 + $0x1c0] sm:$0xff]
  %v71 = vld [vmem:[%s0 + $0x1c8] sm:$0xff]
  %v72 = vld [vmem:[%s0 + $0x1d0] sm:$0xff]
  %v73 = vld [vmem:[%s0 + $0x1d8] sm:$0xff]
  %v74 = vld [vmem:[%s0 + $0x1e0] sm:$0xff]
  %v75 = vld [vmem:[%s0 + $0x1e8] sm:$0xff]
  %v76 = vld [vmem:[%s0 + $0x1f0] sm:$0xff]
  %v77 = vld [vmem:[%s0 + $0x1f8] sm:$0xff]
  %v78 = vld [vmem:[%s1] sm:$0xff]
  %v79 = vld [vmem:[%s1 + $0x8] sm:$0xff]
  %v80 = vld [vmem:[%s1 + $0x10] sm:$0xff]
  %v81 = vld [vmem:[%s1 + $0x18] sm:$0xff]
  %v82 = vld [vmem:[%s1 + $0x20] sm:$0xff]
  %v83 = vld [vmem:[%s1 + $0x28] sm:$0xff]
  %v84 = vld [vmem:[%s1 + $0x30] sm:$0xff]
  %v85 = vld [vmem:[%s1 + $0x38] sm:$0xff]
  %v86 = vld [vmem:[%s1 + $0x40] sm:$0xff]
  %v87 = vld [vmem:[%s2] sm:$0x1]
  %v89 = vlaneseq
  %v90 = vshrl.u32 %v89, 7
  %v91 = vsub.s32 0, %v90
  %v92 = vrot.slane %v87, %v91
  %vm94 = vcmask 588800
  %v96 = vsel %vm94, %v14, 0
  %v99 = vsel %vm94, %v15, 0
  %v102 = vsel %vm94, %v16, 0
  %v105 = vsel %vm94, %v17, 0
  %v108 = vsel %vm94, %v18, 0
  %v111 = vsel %vm94, %v19, 0
  %v114 = vsel %vm94, %v20, 0
  %v117 = vsel %vm94, %v21, 0
  %v120 = vsel %vm94, %v22, 0
  %v123 = vsel %vm94, %v23, 0
  %v126 = vsel %vm94, %v24, 0
  %v129 = vsel %vm94, %v25, 0
  %v132 = vsel %vm94, %v26, 0
  %v135 = vsel %vm94, %v27, 0
  %v138 = vsel %vm94, %v28, 0
  %v141 = vsel %vm94, %v29, 0
  %v144 = vsel %vm94, %v30, 0
  %v147 = vsel %vm94, %v31, 0
  %v150 = vsel %vm94, %v32, 0
  %v153 = vsel %vm94, %v33, 0
  %v156 = vsel %vm94, %v34, 0
  %v159 = vsel %vm94, %v35, 0
  %v162 = vsel %vm94, %v36, 0
  %v165 = vsel %vm94, %v37, 0
  %v168 = vsel %vm94, %v38, 0
  %v171 = vsel %vm94, %v39, 0
  %v174 = vsel %vm94, %v40, 0
  %v177 = vsel %vm94, %v41, 0
  %v180 = vsel %vm94, %v42, 0
  %v183 = vsel %vm94, %v43, 0
  %v186 = vsel %vm94, %v44, 0
  %v189 = vsel %vm94, %v45, 0
  %v192 = vsel %vm94, %v46, 0
  %v195 = vsel %vm94, %v47, 0
  %v198 = vsel %vm94, %v48, 0
  %v201 = vsel %vm94, %v49, 0
  %v204 = vsel %vm94, %v50, 0
  %v207 = vsel %vm94, %v51, 0
  %v210 = vsel %vm94, %v52, 0
  %v213 = vsel %vm94, %v53, 0
  %v216 = vsel %vm94, %v54, 0
  %v219 = vsel %vm94, %v55, 0
  %v222 = vsel %vm94, %v56, 0
  %v225 = vsel %vm94, %v57, 0
  %v228 = vsel %vm94, %v58, 0
  %v231 = vsel %vm94, %v59, 0
  %v234 = vsel %vm94, %v60, 0
  %v237 = vsel %vm94, %v61, 0
  %v240 = vsel %vm94, %v62, 0
  %v243 = vsel %vm94, %v63, 0
  %v246 = vsel %vm94, %v64, 0
  %v249 = vsel %vm94, %v65, 0
  %v252 = vsel %vm94, %v66, 0
  %v255 = vsel %vm94, %v67, 0
  %v258 = vsel %vm94, %v68, 0
  %v261 = vsel %vm94, %v69, 0
  %v264 = vsel %vm94, %v70, 0
  %v267 = vsel %vm94, %v71, 0
  %v270 = vsel %vm94, %v72, 0
  %v273 = vsel %vm94, %v73, 0
  %v276 = vsel %vm94, %v74, 0
  %v279 = vsel %vm94, %v75, 0
  %v282 = vsel %vm94, %v76, 0
  %v285 = vsel %vm94, %v77, 0
  %287 = vmatprep.subr.mxu0 0.0
  %288 = vmatpush1.msra.mxu0 %v78
  %289 = vmatprep.subr.mxu0 0.0
  %290 = vmatpush1.msra.mxu0 %v79
  %291 = vmatprep.subr.mxu0 0.0
  %292 = vmatpush1.msra.mxu0 %v80
  %293 = vmatprep.subr.mxu0 0.0
  %294 = vmatpush1.msra.mxu0 %v81
  %295 = vmatprep.subr.mxu0 0.0
  %296 = vmatpush1.msra.mxu0 %v82
  %297 = vmatprep.subr.mxu0 0.0
  %298 = vmatpush1.msra.mxu0 %v83
  %299 = vmatprep.subr.mxu0 0.0
  %300 = vmatpush1.msra.mxu0 %v84
  %301 = vmatprep.subr.mxu0 0.0
  %302 = vmatpush1.msra.mxu0 %v85
  %303 = vmatprep.subr.mxu0 0.0
  %304 = vmatpush1.msra.mxu0 %v86
  %305 = vmatprep.subr.mxu0 0.0
  %306 = vmatpush1.msra.mxu0 0.0
  %307 = vmatprep.subr.mxu0 0.0
  %308 = vmatpush1.msra.mxu0 0.0
  %309 = vmatprep.subr.mxu0 0.0
  %310 = vmatpush1.msra.mxu0 0.0
  %311 = vmatprep.subr.mxu0 0.0
  %312 = vmatpush1.msra.mxu0 0.0
  %313 = vmatprep.subr.mxu0 0.0
  %314 = vmatpush1.msra.mxu0 0.0
  %315 = vmatprep.subr.mxu0 0.0
  %316 = vmatpush1.msra.mxu0 0.0
  %317 = vmatprep.subr.mxu0 0.0
  %318 = vmatpush1.msra.mxu0 0.0
  %319 = vmatprep.subr.mxu0 0.0
  %320 = vmatpush1.msra.mxu0 0.0
  %321 = vmatprep.subr.mxu0 0.0
  %322 = vmatpush1.msra.mxu0 0.0
  %323 = vmatprep.subr.mxu0 0.0
  %324 = vmatpush1.msra.mxu0 0.0
  %325 = vmatprep.subr.mxu0 0.0
  %326 = vmatpush1.msra.mxu0 0.0
  %327 = vmatprep.subr.mxu0 0.0
  %328 = vmatpush1.msra.mxu0 0.0
  %329 = vmatprep.subr.mxu0 0.0
  %330 = vmatpush1.msra.mxu0 0.0
  %331 = vmatprep.subr.mxu0 0.0
  %332 = vmatpush1.msra.mxu0 0.0
  %333 = vmatprep.subr.mxu0 0.0
  %334 = vmatpush1.msra.mxu0 0.0
  %335 = vmatprep.subr.mxu0 0.0
  %336 = vmatpush1.msra.mxu0 0.0
  %337 = vmatprep.subr.mxu0 0.0
  %338 = vmatpush1.msra.mxu0 0.0
  %339 = vmatprep.subr.mxu0 0.0
  %340 = vmatpush1.msra.mxu0 0.0
  %341 = vmatprep.subr.mxu0 0.0
  %342 = vmatpush1.msra.mxu0 0.0
  %343 = vmatprep.subr.mxu0 0.0
  %344 = vmatpush1.msra.mxu0 0.0
  %345 = vmatprep.subr.mxu0 0.0
  %346 = vmatpush1.msra.mxu0 0.0
  %347 = vmatprep.subr.mxu0 0.0
  %348 = vmatpush1.msra.mxu0 0.0
  %349 = vmatprep.subr.mxu0 0.0
  %350 = vmatpush1.msra.mxu0 0.0
  %351 = vmatprep.mubr.f32.mxu0 0.0
  %352 = vmatmul.mubr.f32.gmra.mrb[0].mxu0 %v96
  %v353 = vpop.f32.mrb[0].mxu0
  %v354 = vadd.f32 %v92, %v353
  %v355 = vpop.f32.mrb[0].mxu0
  %356 = vmatprep.mubr.f32.mxu0 0.0
  %357 = vmatmul.mubr.f32.gmra.mrb[0].mxu0 %v99
  %v358 = vpop.f32.mrb[0].mxu0
  %v359 = vadd.f32 %v92, %v358
  %v360 = vpop.f32.mrb[0].mxu0
  %361 = vmatprep.mubr.f32.mxu0 0.0
  %362 = vmatmul.mubr.f32.gmra.mrb[0].mxu0 %v102
  %v363 = vpop.f32.mrb[0].mxu0
  %v364 = vadd.f32 %v92, %v363
  %v365 = vpop.f32.mrb[0].mxu0
  %366 = vmatprep.mubr.f32.mxu0 0.0
  %367 = vmatmul.mubr.f32.gmra.mrb[0].mxu0 %v105
  %v368 = vpop.f32.mrb[0].mxu0
  %v369 = vadd.f32 %v92, %v368
  %v370 = vpop.f32.mrb[0].mxu0
  %371 = vmatprep.mubr.f32.mxu0 0.0
  %372 = vmatmul.mubr.f32.gmra.mrb[0].mxu0 %v108
  %v373 = vpop.f32.mrb[0].mxu0
  %v374 = vadd.f32 %v92, %v373
  %v375 = vpop.f32.mrb[0].mxu0
  %376 = vmatprep.mubr.f32.mxu0 0.0
  %377 = vmatmul.mubr.f32.gmra.mrb[0].mxu0 %v111
  %v378 = vpop.f32.mrb[0].mxu0
  %v379 = vadd.f32 %v92, %v378
  %v380 = vpop.f32.mrb[0].mxu0
  %381 = vmatprep.mubr.f32.mxu0 0.0
  %382 = vmatmul.mubr.f32.gmra.mrb[0].mxu0 %v114
  %v383 = vpop.f32.mrb[0].mxu0
  %v384 = vadd.f32 %v92, %v383
  %v385 = vpop.f32.mrb[0].mxu0
  %386 = vmatprep.mubr.f32.mxu0 0.0
  %387 = vmatmul.mubr.f32.gmra.mrb[0].mxu0 %v117
  %v388 = vpop.f32.mrb[0].mxu0
  %v389 = vadd.f32 %v92, %v388
  %v390 = vpop.f32.mrb[0].mxu0
  %391 = vmatprep.mubr.f32.mxu0 0.0
  %392 = vmatmul.mubr.f32.gmra.mrb[0].mxu0 %v120
  %v393 = vpop.f32.mrb[0].mxu0
  %v394 = vadd.f32 %v92, %v393
  %v395 = vpop.f32.mrb[0].mxu0
  %396 = vmatprep.mubr.f32.mxu0 0.0
  %397 = vmatmul.mubr.f32.gmra.mrb[0].mxu0 %v123
  %v398 = vpop.f32.mrb[0].mxu0
  %v399 = vadd.f32 %v92, %v398
  %v400 = vpop.f32.mrb[0].mxu0
  %401 = vmatprep.mubr.f32.mxu0 0.0
  %402 = vmatmul.mubr.f32.gmra.mrb[0].mxu0 %v126
  %v403 = vpop.f32.mrb[0].mxu0
  %v404 = vadd.f32 %v92, %v403
  %v405 = vpop.f32.mrb[0].mxu0
  %406 = vmatprep.mubr.f32.mxu0 0.0
  %407 = vmatmul.mubr.f32.gmra.mrb[0].mxu0 %v129
  %v408 = vpop.f32.mrb[0].mxu0
  %v409 = vadd.f32 %v92, %v408
  %v410 = vpop.f32.mrb[0].mxu0
  %411 = vmatprep.mubr.f32.mxu0 0.0
  %412 = vmatmul.mubr.f32.gmra.mrb[0].mxu0 %v132
  %v413 = vpop.f32.mrb[0].mxu0
  %v414 = vadd.f32 %v92, %v413
  %v415 = vpop.f32.mrb[0].mxu0
  %416 = vmatprep.mubr.f32.mxu0 0.0
  %417 = vmatmul.mubr.f32.gmra.mrb[0].mxu0 %v135
  %v418 = vpop.f32.mrb[0].mxu0
  %v419 = vadd.f32 %v92, %v418
  %v420 = vpop.f32.mrb[0].mxu0
  %421 = vmatprep.mubr.f32.mxu0 0.0
  %422 = vmatmul.mubr.f32.gmra.mrb[0].mxu0 %v138
  %v423 = vpop.f32.mrb[0].mxu0
  %v424 = vadd.f32 %v92, %v423
  %v425 = vpop.f32.mrb[0].mxu0
  %426 = vmatprep.mubr.f32.mxu0 0.0
  %427 = vmatmul.mubr.f32.gmra.mrb[0].mxu0 %v141
  %v428 = vpop.f32.mrb[0].mxu0
  %v429 = vadd.f32 %v92, %v428
  %v430 = vpop.f32.mrb[0].mxu0
  %431 = vmatprep.mubr.f32.mxu0 0.0
  %432 = vmatmul.mubr.f32.gmra.mrb[0].mxu0 %v144
  %v433 = vpop.f32.mrb[0].mxu0
  %v434 = vadd.f32 %v92, %v433
  %v435 = vpop.f32.mrb[0].mxu0
  %436 = vmatprep.mubr.f32.mxu0 0.0
  %437 = vmatmul.mubr.f32.gmra.mrb[0].mxu0 %v147
  %v438 = vpop.f32.mrb[0].mxu0
  %v439 = vadd.f32 %v92, %v438
  %v440 = vpop.f32.mrb[0].mxu0
  %441 = vmatprep.mubr.f32.mxu0 0.0
  %442 = vmatmul.mubr.f32.gmra.mrb[0].mxu0 %v150
  %v443 = vpop.f32.mrb[0].mxu0
  %v444 = vadd.f32 %v92, %v443
  %v445 = vpop.f32.mrb[0].mxu0
  %446 = vmatprep.mubr.f32.mxu0 0.0
  %447 = vmatmul.mubr.f32.gmra.mrb[0].mxu0 %v153
  %v448 = vpop.f32.mrb[0].mxu0
  %v449 = vadd.f32 %v92, %v448
  %v450 = vpop.f32.mrb[0].mxu0
  %451 = vmatprep.mubr.f32.mxu0 0.0
  %452 = vmatmul.mubr.f32.gmra.mrb[0].mxu0 %v156
  %v453 = vpop.f32.mrb[0].mxu0
  %v454 = vadd.f32 %v92, %v453
  %v455 = vpop.f32.mrb[0].mxu0
  %456 = vmatprep.mubr.f32.mxu0 0.0
  %457 = vmatmul.mubr.f32.gmra.mrb[0].mxu0 %v159
  %v458 = vpop.f32.mrb[0].mxu0
  %v459 = vadd.f32 %v92, %v458
  %v460 = vpop.f32.mrb[0].mxu0
  %461 = vmatprep.mubr.f32.mxu0 0.0
  %462 = vmatmul.mubr.f32.gmra.mrb[0].mxu0 %v162
  %v463 = vpop.f32.mrb[0].mxu0
  %v464 = vadd.f32 %v92, %v463
  %v465 = vpop.f32.mrb[0].mxu0
  %466 = vmatprep.mubr.f32.mxu0 0.0
  %467 = vmatmul.mubr.f32.gmra.mrb[0].mxu0 %v165
  %v468 = vpop.f32.mrb[0].mxu0
  %v469 = vadd.f32 %v92, %v468
  %v470 = vpop.f32.mrb[0].mxu0
  %471 = vmatprep.mubr.f32.mxu0 0.0
  %472 = vmatmul.mubr.f32.gmra.mrb[0].mxu0 %v168
  %v473 = vpop.f32.mrb[0].mxu0
  %v474 = vadd.f32 %v92, %v473
  %v475 = vpop.f32.mrb[0].mxu0
  %476 = vmatprep.mubr.f32.mxu0 0.0
  %477 = vmatmul.mubr.f32.gmra.mrb[0].mxu0 %v171
  %v478 = vpop.f32.mrb[0].mxu0
  %v479 = vadd.f32 %v92, %v478
  %v480 = vpop.f32.mrb[0].mxu0
  %481 = vmatprep.mubr.f32.mxu0 0.0
  %482 = vmatmul.mubr.f32.gmra.mrb[0].mxu0 %v174
  %v483 = vpop.f32.mrb[0].mxu0
  %v484 = vadd.f32 %v92, %v483
  %v485 = vpop.f32.mrb[0].mxu0
  %486 = vmatprep.mubr.f32.mxu0 0.0
  %487 = vmatmul.mubr.f32.gmra.mrb[0].mxu0 %v177
  %v488 = vpop.f32.mrb[0].mxu0
  %v489 = vadd.f32 %v92, %v488
  %v490 = vpop.f32.mrb[0].mxu0
  %491 = vmatprep.mubr.f32.mxu0 0.0
  %492 = vmatmul.mubr.f32.gmra.mrb[0].mxu0 %v180
  %v493 = vpop.f32.mrb[0].mxu0
  %v494 = vadd.f32 %v92, %v493
  %v495 = vpop.f32.mrb[0].mxu0
  %496 = vmatprep.mubr.f32.mxu0 0.0
  %497 = vmatmul.mubr.f32.gmra.mrb[0].mxu0 %v183
  %v498 = vpop.f32.mrb[0].mxu0
  %v499 = vadd.f32 %v92, %v498
  %v500 = vpop.f32.mrb[0].mxu0
  %501 = vmatprep.mubr.f32.mxu0 0.0
  %502 = vmatmul.mubr.f32.gmra.mrb[0].mxu0 %v186
  %v503 = vpop.f32.mrb[0].mxu0
  %v504 = vadd.f32 %v92, %v503
  %v505 = vpop.f32.mrb[0].mxu0
  %506 = vmatprep.mubr.f32.mxu0 0.0
  %507 = vmatmul.mubr.f32.gmra.mrb[0].mxu0 %v189
  %v508 = vpop.f32.mrb[0].mxu0
  %v509 = vadd.f32 %v92, %v508
  %v510 = vpop.f32.mrb[0].mxu0
  %511 = vmatprep.mubr.f32.mxu0 0.0
  %512 = vmatmul.mubr.f32.gmra.mrb[0].mxu0 %v192
  %v513 = vpop.f32.mrb[0].mxu0
  %v514 = vadd.f32 %v92, %v513
  %v515 = vpop.f32.mrb[0].mxu0
  %516 = vmatprep.mubr.f32.mxu0 0.0
  %517 = vmatmul.mubr.f32.gmra.mrb[0].mxu0 %v195
  %v518 = vpop.f32.mrb[0].mxu0
  %v519 = vadd.f32 %v92, %v518
  %v520 = vpop.f32.mrb[0].mxu0
  %521 = vmatprep.mubr.f32.mxu0 0.0
  %522 = vmatmul.mubr.f32.gmra.mrb[0].mxu0 %v198
  %v523 = vpop.f32.mrb[0].mxu0
  %v524 = vadd.f32 %v92, %v523
  %v525 = vpop.f32.mrb[0].mxu0
  %526 = vmatprep.mubr.f32.mxu0 0.0
  %527 = vmatmul.mubr.f32.gmra.mrb[0].mxu0 %v201
  %v528 = vpop.f32.mrb[0].mxu0
  %v529 = vadd.f32 %v92, %v528
  %v530 = vpop.f32.mrb[0].mxu0
  %531 = vmatprep.mubr.f32.mxu0 0.0
  %532 = vmatmul.mubr.f32.gmra.mrb[0].mxu0 %v204
  %v533 = vpop.f32.mrb[0].mxu0
  %v534 = vadd.f32 %v92, %v533
  %v535 = vpop.f32.mrb[0].mxu0
  %536 = vmatprep.mubr.f32.mxu0 0.0
  %537 = vmatmul.mubr.f32.gmra.mrb[0].mxu0 %v207
  %v538 = vpop.f32.mrb[0].mxu0
  %v539 = vadd.f32 %v92, %v538
  %v540 = vpop.f32.mrb[0].mxu0
  %541 = vmatprep.mubr.f32.mxu0 0.0
  %542 = vmatmul.mubr.f32.gmra.mrb[0].mxu0 %v210
  %v543 = vpop.f32.mrb[0].mxu0
  %v544 = vadd.f32 %v92, %v543
  %v545 = vpop.f32.mrb[0].mxu0
  %546 = vmatprep.mubr.f32.mxu0 0.0
  %547 = vmatmul.mubr.f32.gmra.mrb[0].mxu0 %v213
  %v548 = vpop.f32.mrb[0].mxu0
  %v549 = vadd.f32 %v92, %v548
  %v550 = vpop.f32.mrb[0].mxu0
  %551 = vmatprep.mubr.f32.mxu0 0.0
  %552 = vmatmul.mubr.f32.gmra.mrb[0].mxu0 %v216
  %v553 = vpop.f32.mrb[0].mxu0
  %v554 = vadd.f32 %v92, %v553
  %v555 = vpop.f32.mrb[0].mxu0
  %556 = vmatprep.mubr.f32.mxu0 0.0
  %557 = vmatmul.mubr.f32.gmra.mrb[0].mxu0 %v219
  %v558 = vpop.f32.mrb[0].mxu0
  %v559 = vadd.f32 %v92, %v558
  %v560 = vpop.f32.mrb[0].mxu0
  %561 = vmatprep.mubr.f32.mxu0 0.0
  %562 = vmatmul.mubr.f32.gmra.mrb[0].mxu0 %v222
  %v563 = vpop.f32.mrb[0].mxu0
  %v564 = vadd.f32 %v92, %v563
  %v565 = vpop.f32.mrb[0].mxu0
  %566 = vmatprep.mubr.f32.mxu0 0.0
  %567 = vmatmul.mubr.f32.gmra.mrb[0].mxu0 %v225
  %v568 = vpop.f32.mrb[0].mxu0
  %v569 = vadd.f32 %v92, %v568
  %v570 = vpop.f32.mrb[0].mxu0
  %571 = vmatprep.mubr.f32.mxu0 0.0
  %572 = vmatmul.mubr.f32.gmra.mrb[0].mxu0 %v228
  %v573 = vpop.f32.mrb[0].mxu0
  %v574 = vadd.f32 %v92, %v573
  %v575 = vpop.f32.mrb[0].mxu0
  %576 = vmatprep.mubr.f32.mxu0 0.0
  %577 = vmatmul.mubr.f32.gmra.mrb[0].mxu0 %v231
  %v578 = vpop.f32.mrb[0].mxu0
  %v579 = vadd.f32 %v92, %v578
  %v580 = vpop.f32.mrb[0].mxu0
  %581 = vmatprep.mubr.f32.mxu0 0.0
  %582 = vmatmul.mubr.f32.gmra.mrb[0].mxu0 %v234
  %v583 = vpop.f32.mrb[0].mxu0
  %v584 = vadd.f32 %v92, %v583
  %v585 = vpop.f32.mrb[0].mxu0
  %586 = vmatprep.mubr.f32.mxu0 0.0
  %587 = vmatmul.mubr.f32.gmra.mrb[0].mxu0 %v237
  %v588 = vpop.f32.mrb[0].mxu0
  %v589 = vadd.f32 %v92, %v588
  %v590 = vpop.f32.mrb[0].mxu0
  %591 = vmatprep.mubr.f32.mxu0 0.0
  %592 = vmatmul.mubr.f32.gmra.mrb[0].mxu0 %v240
  %v593 = vpop.f32.mrb[0].mxu0
  %v594 = vadd.f32 %v92, %v593
  %v595 = vpop.f32.mrb[0].mxu0
  %596 = vmatprep.mubr.f32.mxu0 0.0
  %597 = vmatmul.mubr.f32.gmra.mrb[0].mxu0 %v243
  %v598 = vpop.f32.mrb[0].mxu0
  %v599 = vadd.f32 %v92, %v598
  %v600 = vpop.f32.mrb[0].mxu0
  %601 = vmatprep.mubr.f32.mxu0 0.0
  %602 = vmatmul.mubr.f32.gmra.mrb[0].mxu0 %v246
  %v603 = vpop.f32.mrb[0].mxu0
  %v604 = vadd.f32 %v92, %v603
  %v605 = vpop.f32.mrb[0].mxu0
  %606 = vmatprep.mubr.f32.mxu0 0.0
  %607 = vmatmul.mubr.f32.gmra.mrb[0].mxu0 %v249
  %v608 = vpop.f32.mrb[0].mxu0
  %v609 = vadd.f32 %v92, %v608
  %v610 = vpop.f32.mrb[0].mxu0
  %611 = vmatprep.mubr.f32.mxu0 0.0
  %612 = vmatmul.mubr.f32.gmra.mrb[0].mxu0 %v252
  %v613 = vpop.f32.mrb[0].mxu0
  %v614 = vadd.f32 %v92, %v613
  %v615 = vpop.f32.mrb[0].mxu0
  %616 = vmatprep.mubr.f32.mxu0 0.0
  %617 = vmatmul.mubr.f32.gmra.mrb[0].mxu0 %v255
  %v618 = vpop.f32.mrb[0].mxu0
  %v619 = vadd.f32 %v92, %v618
  %v620 = vpop.f32.mrb[0].mxu0
  %621 = vmatprep.mubr.f32.mxu0 0.0
  %622 = vmatmul.mubr.f32.gmra.mrb[0].mxu0 %v258
  %v623 = vpop.f32.mrb[0].mxu0
  %v624 = vadd.f32 %v92, %v623
  %v625 = vpop.f32.mrb[0].mxu0
  %626 = vmatprep.mubr.f32.mxu0 0.0
  %627 = vmatmul.mubr.f32.gmra.mrb[0].mxu0 %v261
  %v628 = vpop.f32.mrb[0].mxu0
  %v629 = vadd.f32 %v92, %v628
  %v630 = vpop.f32.mrb[0].mxu0
  %631 = vmatprep.mubr.f32.mxu0 0.0
  %632 = vmatmul.mubr.f32.gmra.mrb[0].mxu0 %v264
  %v633 = vpop.f32.mrb[0].mxu0
  %v634 = vadd.f32 %v92, %v633
  %v635 = vpop.f32.mrb[0].mxu0
  %636 = vmatprep.mubr.f32.mxu0 0.0
  %637 = vmatmul.mubr.f32.gmra.mrb[0].mxu0 %v267
  %v638 = vpop.f32.mrb[0].mxu0
  %v639 = vadd.f32 %v92, %v638
  %v640 = vpop.f32.mrb[0].mxu0
  %641 = vmatprep.mubr.f32.mxu0 0.0
  %642 = vmatmul.mubr.f32.gmra.mrb[0].mxu0 %v270
  %v643 = vpop.f32.mrb[0].mxu0
  %v644 = vadd.f32 %v92, %v643
  %v645 = vpop.f32.mrb[0].mxu0
  %646 = vmatprep.mubr.f32.mxu0 0.0
  %647 = vmatmul.mubr.f32.gmra.mrb[0].mxu0 %v273
  %v648 = vpop.f32.mrb[0].mxu0
  %v649 = vadd.f32 %v92, %v648
  %v650 = vpop.f32.mrb[0].mxu0
  %651 = vmatprep.mubr.f32.mxu0 0.0
  %652 = vmatmul.mubr.f32.gmra.mrb[0].mxu0 %v276
  %v653 = vpop.f32.mrb[0].mxu0
  %v654 = vadd.f32 %v92, %v653
  %v655 = vpop.f32.mrb[0].mxu0
  %656 = vmatprep.mubr.f32.mxu0 0.0
  %657 = vmatmul.mubr.f32.gmra.mrb[0].mxu0 %v279
  %v658 = vpop.f32.mrb[0].mxu0
  %v659 = vadd.f32 %v92, %v658
  %v660 = vpop.f32.mrb[0].mxu0
  %661 = vmatprep.mubr.f32.mxu0 0.0
  %662 = vmatmul.mubr.f32.gmra.mrb[0].mxu0 %v282
  %v663 = vpop.f32.mrb[0].mxu0
  %v664 = vadd.f32 %v92, %v663
  %v665 = vpop.f32.mrb[0].mxu0
  %666 = vmatprep.mubr.f32.mxu0 0.0
  %667 = vmatmul.mubr.f32.gmra.mrb[0].mxu0 %v285
  %v668 = vpop.f32.mrb[0].mxu0
  %v669 = vadd.f32 %v92, %v668
  %v670 = vpop.f32.mrb[0].mxu0
  %671 = vdwg.mxu0
  %672 = vst [vmem:[%s3] sm:$0xff] %v354
  %673 = vst [vmem:[%s3 + $0x8] sm:$0xff] %v359
  %674 = vst [vmem:[%s3 + $0x10] sm:$0xff] %v364
  %675 = vst [vmem:[%s3 + $0x18] sm:$0xff] %v369
  %676 = vst [vmem:[%s3 + $0x20] sm:$0xff] %v374
  %677 = vst [vmem:[%s3 + $0x28] sm:$0xff] %v379
  %678 = vst [vmem:[%s3 + $0x30] sm:$0xff] %v384
  %679 = vst [vmem:[%s3 + $0x38] sm:$0xff] %v389
  %680 = vst [vmem:[%s3 + $0x40] sm:$0xff] %v394
  %681 = vst [vmem:[%s3 + $0x48] sm:$0xff] %v399
  %682 = vst [vmem:[%s3 + $0x50] sm:$0xff] %v404
  %683 = vst [vmem:[%s3 + $0x58] sm:$0xff] %v409
  %684 = vst [vmem:[%s3 + $0x60] sm:$0xff] %v414
  %685 = vst [vmem:[%s3 + $0x68] sm:$0xff] %v419
  %686 = vst [vmem:[%s3 + $0x70] sm:$0xff] %v424
  %687 = vst [vmem:[%s3 + $0x78] sm:$0xff] %v429
  %688 = vst [vmem:[%s3 + $0x80] sm:$0xff] %v434
  %689 = vst [vmem:[%s3 + $0x88] sm:$0xff] %v439
  %690 = vst [vmem:[%s3 + $0x90] sm:$0xff] %v444
  %691 = vst [vmem:[%s3 + $0x98] sm:$0xff] %v449
  %692 = vst [vmem:[%s3 + $0xa0] sm:$0xff] %v454
  %693 = vst [vmem:[%s3 + $0xa8] sm:$0xff] %v459
  %694 = vst [vmem:[%s3 + $0xb0] sm:$0xff] %v464
  %695 = vst [vmem:[%s3 + $0xb8] sm:$0xff] %v469
  %696 = vst [vmem:[%s3 + $0xc0] sm:$0xff] %v474
  %697 = vst [vmem:[%s3 + $0xc8] sm:$0xff] %v479
  %698 = vst [vmem:[%s3 + $0xd0] sm:$0xff] %v484
  %699 = vst [vmem:[%s3 + $0xd8] sm:$0xff] %v489
  %700 = vst [vmem:[%s3 + $0xe0] sm:$0xff] %v494
  %701 = vst [vmem:[%s3 + $0xe8] sm:$0xff] %v499
  %702 = vst [vmem:[%s3 + $0xf0] sm:$0xff] %v504
  %703 = vst [vmem:[%s3 + $0xf8] sm:$0xff] %v509
  %704 = vst [vmem:[%s3 + $0x100] sm:$0xff] %v514
  %705 = vst [vmem:[%s3 + $0x108] sm:$0xff] %v519
  %706 = vst [vmem:[%s3 + $0x110] sm:$0xff] %v524
  %707 = vst [vmem:[%s3 + $0x118] sm:$0xff] %v529
  %708 = vst [vmem:[%s3 + $0x120] sm:$0xff] %v534
  %709 = vst [vmem:[%s3 + $0x128] sm:$0xff] %v539
  %710 = vst [vmem:[%s3 + $0x130] sm:$0xff] %v544
  %711 = vst [vmem:[%s3 + $0x138] sm:$0xff] %v549
  %712 = vst [vmem:[%s3 + $0x140] sm:$0xff] %v554
  %713 = vst [vmem:[%s3 + $0x148] sm:$0xff] %v559
  %714 = vst [vmem:[%s3 + $0x150] sm:$0xff] %v564
  %715 = vst [vmem:[%s3 + $0x158] sm:$0xff] %v569
  %716 = vst [vmem:[%s3 + $0x160] sm:$0xff] %v574
  %717 = vst [vmem:[%s3 + $0x168] sm:$0xff] %v579
  %718 = vst [vmem:[%s3 + $0x170] sm:$0xff] %v584
  %719 = vst [vmem:[%s3 + $0x178] sm:$0xff] %v589
  %720 = vst [vmem:[%s3 + $0x180] sm:$0xff] %v594
  %721 = vst [vmem:[%s3 + $0x188] sm:$0xff] %v599
  %722 = vst [vmem:[%s3 + $0x190] sm:$0xff] %v604
  %723 = vst [vmem:[%s3 + $0x198] sm:$0xff] %v609
  %724 = vst [vmem:[%s3 + $0x1a0] sm:$0xff] %v614
  %725 = vst [vmem:[%s3 + $0x1a8] sm:$0xff] %v619
  %726 = vst [vmem:[%s3 + $0x1b0] sm:$0xff] %v624
  %727 = vst [vmem:[%s3 + $0x1b8] sm:$0xff] %v629
  %728 = vst [vmem:[%s3 + $0x1c0] sm:$0xff] %v634
  %729 = vst [vmem:[%s3 + $0x1c8] sm:$0xff] %v639
  %730 = vst [vmem:[%s3 + $0x1d0] sm:$0xff] %v644
  %731 = vst [vmem:[%s3 + $0x1d8] sm:$0xff] %v649
  %732 = vst [vmem:[%s3 + $0x1e0] sm:$0xff] %v654
  %733 = vst [vmem:[%s3 + $0x1e8] sm:$0xff] %v659
  %734 = vst [vmem:[%s3 + $0x1f0] sm:$0xff] %v664
  %735 = vst [vmem:[%s3 + $0x1f8] sm:$0xff] %v669
  // Predicated region
  $region14: #{grouped_conv2d_forward.1} parent=0 // pred_check
    _
  $region15: #{grouped_conv2d_forward.1} parent=0 // pred_check_branch
    %737 = sbr.rel (0) target = $region17
  $region16: #{grouped_conv2d_forward.1} parent=0 // pred_region
    _
  $region17: #{grouped_conv2d_forward.1} parent=0 // pred_fallthru
    _
  // Predicated region
  $region18: #{grouped_conv2d_forward.1} parent=0 // pred_check
    _
  $region19: #{grouped_conv2d_forward.1} parent=0 // pred_check_branch
    %739 = sbr.rel (0) target = $region21
  $region20: #{grouped_conv2d_forward.1} parent=0 // pred_region
    _
  $region21: #{grouped_conv2d_forward.1} parent=0 // pred_fallthru
    _

</llo_original>
